<compile_context>
chip_gen: v7x
topology: tpu7x:2x2x1
jax: 0.10.0
libtpu: 0.0.40
codegen_flags: <defaults>
</compile_context>

<pallas_src>
import functools
import math

import jax
import jax.numpy as jnp
from jax import lax
from jax.experimental import pallas as pl
from jax.experimental.pallas import tpu as pltpu


def _round_up(x, m):
    return (x + m - 1) // m * m


def _geglu_kernel(x_ref, w_ref, b_ref, o_ref, acc_ref):
    """Grid = (M//tm, N//tn, K//tk); reduction axis (k) last.

    x_ref:   (tm, tk)      activation tile (native dtype)
    w_ref:   (tk, 2*tn)    fused [w_x_block | w_g_block] weight tile (native dtype)
    b_ref:   (1,  2*tn)    fused [b_x_block | b_g_block] bias tile (f32)
    o_ref:   (tm, tn)      output tile
    acc_ref: (tm, 2*tn)    f32 accumulator scratch (resident across k)
    """
    k = pl.program_id(2)

    @pl.when(k == 0)
    def _():
        acc_ref[...] = jnp.zeros_like(acc_ref)

    acc_ref[...] += jnp.dot(x_ref[...], w_ref[...],
                            preferred_element_type=jnp.float32)

    @pl.when(k == pl.num_programs(2) - 1)
    def _():
        tn = o_ref.shape[-1]
        acc = acc_ref[...] + b_ref[...]          # f32, bias broadcast over rows
        proj = acc[:, :tn]
        gate = acc[:, tn:]
        # Exact (erf-based) GELU — matches torch.nn.functional.gelu default.
        inv_sqrt2 = jnp.float32(1.0 / math.sqrt(2.0))
        gelu_gate = 0.5 * gate * (1.0 + lax.erf(gate * inv_sqrt2))
        o_ref[...] = (proj * gelu_gate).astype(o_ref.dtype)


@functools.partial(jax.jit, static_argnames=("tm", "tn", "tk"))
def geglu_pallas(x, weight, bias, *, tm=256, tn=256, tk=512):
    """x: (B, S, dim_in); weight: (2*dim_out, dim_in) [PyTorch layout]; bias: (2*dim_out,)."""
    B, S, dim_in = x.shape
    dim_out = weight.shape[0] // 2
    M = B * S

    # --- tile sizes (shrink to padded problem size, keep HW-friendly multiples) ---
    tm = min(tm, _round_up(M, 8))            # second-minor: multiple of 8
    tn = min(tn, _round_up(dim_out, 128))    # lane axis: multiple of 128
    tk = min(tk, _round_up(dim_in, 128))

    M_pad = _round_up(M, tm)
    N_pad = _round_up(dim_out, tn)
    K_pad = _round_up(dim_in, tk)
    nj = N_pad // tn

    # --- parameter prep (done once, in plain JAX) ---
    w_x = weight[:dim_out, :].T              # (dim_in, dim_out)
    w_g = weight[dim_out:, :].T
    w_x = jnp.pad(w_x, ((0, K_pad - dim_in), (0, N_pad - dim_out)))
    w_g = jnp.pad(w_g, ((0, K_pad - dim_in), (0, N_pad - dim_out)))
    # Interleave per tn-block: columns [j*2tn : (j+1)*2tn] = [w_x block j | w_g block j].
    w_fused = jnp.concatenate(
        [w_x.reshape(K_pad, nj, tn), w_g.reshape(K_pad, nj, tn)], axis=-1
    ).reshape(K_pad, 2 * N_pad).astype(x.dtype)

    b_x = jnp.pad(bias[:dim_out], (0, N_pad - dim_out))
    b_g = jnp.pad(bias[dim_out:], (0, N_pad - dim_out))
    b_fused = jnp.concatenate(
        [b_x.reshape(nj, tn), b_g.reshape(nj, tn)], axis=-1
    ).reshape(1, 2 * N_pad).astype(jnp.float32)

    # --- activation prep: flatten + pad M and K (zero K-padding contributes nothing) ---
    x2d = x.reshape(M, dim_in)
    x2d = jnp.pad(x2d, ((0, M_pad - M), (0, K_pad - dim_in)))

    grid = (M_pad // tm, N_pad // tn, K_pad // tk)

    out2d = pl.pallas_call(
        _geglu_kernel,
        out_shape=jax.ShapeDtypeStruct((M_pad, N_pad), x.dtype),
        grid_spec=pltpu.PrefetchScalarGridSpec(
            num_scalar_prefetch=0,
            grid=grid,
            in_specs=[
                pl.BlockSpec((tm, tk), lambda i, j, k: (i, k)),        # x
                pl.BlockSpec((tk, 2 * tn), lambda i, j, k: (k, j)),    # fused weights
                pl.BlockSpec((1, 2 * tn), lambda i, j, k: (0, j)),     # fused bias
            ],
            out_specs=pl.BlockSpec((tm, tn), lambda i, j, k: (i, j)),
            scratch_shapes=[pltpu.VMEM((tm, 2 * tn), jnp.float32)],
        ),
        compiler_params=pltpu.CompilerParams(
            dimension_semantics=("parallel", "parallel", "arbitrary"),
            vmem_limit_bytes=48 * 1024 * 1024,   # headroom, still < v7x 64 MiB physical
        ),
    )(x2d, w_fused, b_fused)

    return out2d[:M, :dim_out].reshape(B, S, dim_out)


def geglu_reference(x, weight, bias):
    """Plain-JAX reference mirroring the PyTorch module (exact erf GELU)."""
    proj = jnp.einsum("bsd,nd->bsn", x.astype(jnp.float32),
                      weight.astype(jnp.float32)) + bias.astype(jnp.float32)
    dim_out = weight.shape[0] // 2
    a, gate = proj[..., :dim_out], proj[..., dim_out:]
    return a * (0.5 * gate * (1.0 + lax.erf(gate / jnp.sqrt(2.0))))


def _make_params(key, dim_in, dim_out, dtype):
    k_w, k_b = jax.random.split(key)
    bound = 1.0 / math.sqrt(dim_in)
    weight = jax.random.uniform(k_w, (2 * dim_out, dim_in), jnp.float32,
                                minval=-bound, maxval=bound).astype(dtype)
    bias = jax.random.uniform(k_b, (2 * dim_out,), jnp.float32,
                              minval=-bound, maxval=bound).astype(dtype)
    return weight, bias


if __name__ == "__main__":
    root = jax.random.PRNGKey(0)
    k1, k2, k3, k4 = jax.random.split(root, 4)

    # --- test 1: small shape, f32, exact parity with the reference ---
    batch, seq, dim_in, dim_out = 2, 8, 32, 32
    weight, bias = _make_params(k1, dim_in, dim_out, jnp.float32)
    x = jax.random.normal(k2, (batch, seq, dim_in), jnp.float32)

    out = jax.block_until_ready(geglu_pallas(x, weight, bias))
    ref = geglu_reference(x, weight, bias)
    assert out.shape == (batch, seq, dim_out)
    assert jnp.allclose(out, ref, atol=1e-5, rtol=1e-5), "f32 mismatch vs reference"

    # --- test 2: non-aligned dims, small tiles -> exercises M/N/K grid + padding paths ---
    batch2, seq2, dim_in2, dim_out2 = 2, 40, 160, 192
    weight2, bias2 = _make_params(k3, dim_in2, dim_out2, jnp.float32)
    x2 = jax.random.normal(k4, (batch2, seq2, dim_in2), jnp.float32)

    out2 = jax.block_until_ready(
        geglu_pallas(x2, weight2, bias2, tm=64, tn=128, tk=128))
    ref2 = geglu_reference(x2, weight2, bias2)
    assert out2.shape == (batch2, seq2, dim_out2)
    assert jnp.allclose(out2, ref2, atol=1e-4, rtol=1e-4), "tiled mismatch vs reference"

    # --- test 3: bf16 fast path (bf16 MXU operands, f32 accumulation) ---
    out3 = jax.block_until_ready(
        geglu_pallas(x2.astype(jnp.bfloat16),
                     weight2.astype(jnp.bfloat16),
                     bias2.astype(jnp.bfloat16),
                     tm=64, tn=128, tk=128))
    assert out3.dtype == jnp.bfloat16
    assert jnp.allclose(out3.astype(jnp.float32), ref2, atol=5e-2, rtol=5e-2), \
        "bf16 mismatch vs reference"

    print("KERNEL_OK")
</pallas_src>

<mosaic_0001>
module attributes {stable_mosaic.version = 11 : i64} {
  func.func @_geglu_kernel(%arg0: i32, %arg1: i32, %arg2: i32, %arg3: memref<16x128xf32, #tpu.memory_space<vmem>>, %arg4: memref<128x256xf32, #tpu.memory_space<vmem>>, %arg5: memref<1x256xf32, #tpu.memory_space<vmem>>, %arg6: memref<16x128xf32, #tpu.memory_space<vmem>>, %arg7: memref<16x256xf32, #tpu.memory_space<vmem>>) attributes {dimension_semantics = [#tpu.dimension_semantics<parallel>, #tpu.dimension_semantics<parallel>, #tpu.dimension_semantics<arbitrary>], iteration_bounds = array<i64: 1, 1, 1>, scalar_prefetch = 0 : i64, scratch_operands = 1 : i64, tpu.core_type = #tpu.core_type<tc>, window_params = [{transform_indices = @transform_0, window_bounds = array<i64: 16, 128>}, {transform_indices = @transform_1, window_bounds = array<i64: 128, 256>}, {transform_indices = @transform_2, window_bounds = array<i64: 1, 256>}, {transform_indices = @transform_3, window_bounds = array<i64: 16, 128>}]} {
    %c0_i32 = arith.constant 0 : i32
    %0 = arith.cmpi eq, %arg2, %c0_i32 : i32
    %1 = arith.extui %0 : i1 to i32
    %c0_i32_0 = arith.constant 0 : i32
    %2 = arith.cmpi ne, %1, %c0_i32_0 : i32
    scf.if %2 {
      %cst_10 = arith.constant 0.000000e+00 : f32
      %12 = vector.broadcast %cst_10 : f32 to vector<16x256xf32>
      %c0_11 = arith.constant 0 : index
      %c0_12 = arith.constant 0 : index
      %13 = vector.load %arg7[%c0_11, %c0_12] : memref<16x256xf32, #tpu.memory_space<vmem>>, vector<16x256xf32>
      tpu.vector_store %arg7[%c0_11, %c0_12], %12 {strides = array<i32>} : memref<16x256xf32, #tpu.memory_space<vmem>>, vector<16x256xf32>,
    } else {
    }
    %c0 = arith.constant 0 : index
    %c0_1 = arith.constant 0 : index
    %3 = vector.load %arg7[%c0, %c0_1] : memref<16x256xf32, #tpu.memory_space<vmem>>, vector<16x256xf32>
    %c0_2 = arith.constant 0 : index
    %c0_3 = arith.constant 0 : index
    %4 = vector.load %arg3[%c0_2, %c0_3] : memref<16x128xf32, #tpu.memory_space<vmem>>, vector<16x128xf32>
    %c0_4 = arith.constant 0 : index
    %c0_5 = arith.constant 0 : index
    %5 = vector.load %arg4[%c0_4, %c0_5] : memref<128x256xf32, #tpu.memory_space<vmem>>, vector<128x256xf32>
    %cst = arith.constant dense<0.000000e+00> : vector<16x256xf32>
    %6 = tpu.matmul %4, %5, %cst {dimension_numbers = #tpu.dot_dimension_numbers<[1], [0], [0], [1], [0, 0, 1, 1], [], []>} : vector<16x128xf32>, vector<128x256xf32>, vector<16x256xf32> -> vector<16x256xf32>
    %7 = arith.addf %3, %6 : vector<16x256xf32>
    %c0_6 = arith.constant 0 : index
    %c0_7 = arith.constant 0 : index
    %8 = vector.load %arg7[%c0_6, %c0_7] : memref<16x256xf32, #tpu.memory_space<vmem>>, vector<16x256xf32>
    tpu.vector_store %arg7[%c0_6, %c0_7], %7 {strides = array<i32>} : memref<16x256xf32, #tpu.memory_space<vmem>>, vector<16x256xf32>,
    %c0_i32_8 = arith.constant 0 : i32
    %9 = arith.cmpi eq, %arg2, %c0_i32_8 : i32
    %10 = arith.extui %9 : i1 to i32
    %c0_i32_9 = arith.constant 0 : i32
    %11 = arith.cmpi ne, %10, %c0_i32_9 : i32
    scf.if %11 {
      %c0_10 = arith.constant 0 : index
      %c0_11 = arith.constant 0 : index
      %12 = vector.load %arg7[%c0_10, %c0_11] : memref<16x256xf32, #tpu.memory_space<vmem>>, vector<16x256xf32>
      %c0_12 = arith.constant 0 : index
      %c0_13 = arith.constant 0 : index
      %13 = vector.load %arg5[%c0_12, %c0_13] : memref<1x256xf32, #tpu.memory_space<vmem>>, vector<1x256xf32>
      %14 = vector.broadcast %13 : vector<1x256xf32> to vector<16x256xf32>
      %15 = arith.addf %12, %14 : vector<16x256xf32>
      %16 = vector.extract_strided_slice %15 {offsets = [0, 0], sizes = [16, 128], strides = [1, 1]} : vector<16x256xf32> to vector<16x128xf32>
      %17 = vector.extract_strided_slice %15 {offsets = [0, 128], sizes = [16, 128], strides = [1, 1]} : vector<16x256xf32> to vector<16x128xf32>
      %cst_14 = arith.constant 5.000000e-01 : f32
      %18 = vector.broadcast %cst_14 : f32 to vector<16x128xf32>
      %19 = arith.mulf %18, %17 : vector<16x128xf32>
      %cst_15 = arith.constant 0.707106769 : f32
      %20 = vector.broadcast %cst_15 : f32 to vector<16x128xf32>
      %21 = arith.mulf %17, %20 : vector<16x128xf32>
      %22 = math.erf %21 : vector<16x128xf32>
      %cst_16 = arith.constant 1.000000e+00 : f32
      %23 = vector.broadcast %cst_16 : f32 to vector<16x128xf32>
      %24 = arith.addf %23, %22 : vector<16x128xf32>
      %25 = arith.mulf %19, %24 : vector<16x128xf32>
      %26 = arith.mulf %16, %25 : vector<16x128xf32>
      %c0_17 = arith.constant 0 : index
      %c0_18 = arith.constant 0 : index
      %27 = vector.load %arg6[%c0_17, %c0_18] : memref<16x128xf32, #tpu.memory_space<vmem>>, vector<16x128xf32>
      tpu.vector_store %arg6[%c0_17, %c0_18], %26 {strides = array<i32>} : memref<16x128xf32, #tpu.memory_space<vmem>>, vector<16x128xf32>,
    } else {
    }
    return
  }
  func.func @transform_0(%arg0: i32, %arg1: i32, %arg2: i32) -> (i32, i32) {
    %c0_i32 = arith.constant 0 : i32
    return %arg0, %arg2 : i32, i32
  }
  func.func @transform_1(%arg0: i32, %arg1: i32, %arg2: i32) -> (i32, i32) {
    %c0_i32 = arith.constant 0 : i32
    return %arg2, %arg1 : i32, i32
  }
  func.func @transform_2(%arg0: i32, %arg1: i32, %arg2: i32) -> (i32, i32) {
    %c0_i32 = arith.constant 0 : i32
    %c0_i32_0 = arith.constant 0 : i32
    return %c0_i32, %arg1 : i32, i32
  }
  func.func @transform_3(%arg0: i32, %arg1: i32, %arg2: i32) -> (i32, i32) {
    %c0_i32 = arith.constant 0 : i32
    return %arg0, %arg1 : i32, i32
  }
}

</mosaic_0001>

<llo_original>
// kernel: geglu_pallas.1
$region0: #{geglu_pallas.1}
  #allocation0 [shape = 'u32[]', space=smem, size = 0x4, offset = 0x4, fixed_abs, tag = 'smem constant byte address 0x4 - core index']
  #allocation1 [shape = 'u32[144,128]{1,0:T(1,128)}', space=vmem, size = 0x12000, scoped, tag = 'internal scratch']
  #allocation2 [shape = 'f32[16,256]{1,0:T(8,128)}', space=vmem, size = 0x4000, scoped, tag = 'scratch operand']
  %s0 = inlined_call_operand.vmem [shape: f32[16,128], index: 0, kind: input, shape index: {}]
  %s1 = inlined_call_operand.vmem [shape: f32[128,256], index: 1, kind: input, shape index: {}]
  %s2 = inlined_call_operand.vmem [shape: f32[1,256], index: 2, kind: input, shape index: {}]
  %s3 = inlined_call_operand.vmem [shape: f32[16,128], index: 3, kind: output, shape index: {}]
  %s4 = sld [smem:[#allocation0]]
  $region30: #{geglu_pallas.1} parent=0
    _
  %s6 = ssub.s32 1, %s4
  %s7 = scalar_select 0, %s6, %s4
  // Predicated region
  $region2: #{geglu_pallas.1} parent=0 // pred_check
    _
  $region3: #{geglu_pallas.1} parent=0 // pred_check_branch
    %9 = sbr.rel (0) target = $region5
  $region4: #{geglu_pallas.1} parent=0 // pred_region
    _
  $region5: #{geglu_pallas.1} parent=0 // pred_fallthru
    _
  // Predicated region
  $region6: #{geglu_pallas.1} parent=0 // pred_check
    _
  $region7: #{geglu_pallas.1} parent=0 // pred_check_branch
    %11 = sbr.rel (0) target = $region9
  $region8: #{geglu_pallas.1} parent=0 // pred_region
    _
  $region9: #{geglu_pallas.1} parent=0 // pred_fallthru
    _
  // Predicated region
  $region10: #{geglu_pallas.1} parent=0 // pred_check
    _
  $region11: #{geglu_pallas.1} parent=0 // pred_check_branch
    %13 = sbr.rel (0) target = $region13
  $region12: #{geglu_pallas.1} parent=0 // pred_region
    _
  $region13: #{geglu_pallas.1} parent=0 // pred_fallthru
    _
  %p14 = scmp.eq.s32.totalorder 0, 0
  // Predicated region
  $region14: #{geglu_pallas.1} parent=0 // pred_check
    %p15 = pneg %p14
  $region15: #{geglu_pallas.1} parent=0 // pred_check_branch
    %17 = sbr.rel (%p15) target = $region17
  $region16: #{geglu_pallas.1} parent=0 // pred_region
    %18 = vst [vmem:[#allocation2] sm:$0xff] 0.0
    %19 = vst [vmem:[#allocation2 + $0x8] sm:$0xff] 0.0
    %20 = vst [vmem:[#allocation2 + $0x10] sm:$0xff] 0.0
    %21 = vst [vmem:[#allocation2 + $0x18] sm:$0xff] 0.0
  $region17: #{geglu_pallas.1} parent=0 // pred_fallthru
    _
  %v22 = vld [vmem:[#allocation2] sm:$0xff]
  %v23 = vld [vmem:[#allocation2 + $0x8] sm:$0xff]
  %v24 = vld [vmem:[#allocation2 + $0x10] sm:$0xff]
  %v25 = vld [vmem:[#allocation2 + $0x18] sm:$0xff]
  %v26 = vld [vmem:[%s0] sm:$0xff]
  %v27 = vld [vmem:[%s0 + $0x8] sm:$0xff]
  %v28 = vld [vmem:[%s1] sm:$0xff]
  %v29 = vld [vmem:[%s1 + $0x8] sm:$0xff]
  %v30 = vld [vmem:[%s1 + $0x10] sm:$0xff]
  %v31 = vld [vmem:[%s1 + $0x18] sm:$0xff]
  %v32 = vld [vmem:[%s1 + $0x20] sm:$0xff]
  %v33 = vld [vmem:[%s1 + $0x28] sm:$0xff]
  %v34 = vld [vmem:[%s1 + $0x30] sm:$0xff]
  %v35 = vld [vmem:[%s1 + $0x38] sm:$0xff]
  %v36 = vld [vmem:[%s1 + $0x40] sm:$0xff]
  %v37 = vld [vmem:[%s1 + $0x48] sm:$0xff]
  %v38 = vld [vmem:[%s1 + $0x50] sm:$0xff]
  %v39 = vld [vmem:[%s1 + $0x58] sm:$0xff]
  %v40 = vld [vmem:[%s1 + $0x60] sm:$0xff]
  %v41 = vld [vmem:[%s1 + $0x68] sm:$0xff]
  %v42 = vld [vmem:[%s1 + $0x70] sm:$0xff]
  %v43 = vld [vmem:[%s1 + $0x78] sm:$0xff]
  %v44 = vld [vmem:[%s1 + $0x80] sm:$0xff]
  %v45 = vld [vmem:[%s1 + $0x88] sm:$0xff]
  %v46 = vld [vmem:[%s1 + $0x90] sm:$0xff]
  %v47 = vld [vmem:[%s1 + $0x98] sm:$0xff]
  %v48 = vld [vmem:[%s1 + $0xa0] sm:$0xff]
  %v49 = vld [vmem:[%s1 + $0xa8] sm:$0xff]
  %v50 = vld [vmem:[%s1 + $0xb0] sm:$0xff]
  %v51 = vld [vmem:[%s1 + $0xb8] sm:$0xff]
  %v52 = vld [vmem:[%s1 + $0xc0] sm:$0xff]
  %v53 = vld [vmem:[%s1 + $0xc8] sm:$0xff]
  %v54 = vld [vmem:[%s1 + $0xd0] sm:$0xff]
  %v55 = vld [vmem:[%s1 + $0xd8] sm:$0xff]
  %v56 = vld [vmem:[%s1 + $0xe0] sm:$0xff]
  %v57 = vld [vmem:[%s1 + $0xe8] sm:$0xff]
  %v58 = vld [vmem:[%s1 + $0xf0] sm:$0xff]
  %v59 = vld [vmem:[%s1 + $0xf8] sm:$0xff]
  %60 = vmatprep.subr.mxu0 %v29
  %61 = vmatpush1.msra.mxu0 %v28
  %62 = vmatprep.subr.mxu0 %v31
  %63 = vmatpush1.msra.mxu0 %v30
  %64 = vmatprep.subr.mxu0 %v33
  %65 = vmatpush1.msra.mxu0 %v32
  %66 = vmatprep.subr.mxu0 %v35
  %67 = vmatpush1.msra.mxu0 %v34
  %68 = vmatprep.subr.mxu0 %v37
  %69 = vmatpush1.msra.mxu0 %v36
  %70 = vmatprep.subr.mxu0 %v39
  %71 = vmatpush1.msra.mxu0 %v38
  %72 = vmatprep.subr.mxu0 %v41
  %73 = vmatpush1.msra.mxu0 %v40
  %74 = vmatprep.subr.mxu0 %v43
  %75 = vmatpush1.msra.mxu0 %v42
  %76 = vmatprep.subr.mxu0 %v45
  %77 = vmatpush1.msra.mxu0 %v44
  %78 = vmatprep.subr.mxu0 %v47
  %79 = vmatpush1.msra.mxu0 %v46
  %80 = vmatprep.subr.mxu0 %v49
  %81 = vmatpush1.msra.mxu0 %v48
  %82 = vmatprep.subr.mxu0 %v51
  %83 = vmatpush1.msra.mxu0 %v50
  %84 = vmatprep.subr.mxu0 %v53
  %85 = vmatpush1.msra.mxu0 %v52
  %86 = vmatprep.subr.mxu0 %v55
  %87 = vmatpush1.msra.mxu0 %v54
  %88 = vmatprep.subr.mxu0 %v57
  %89 = vmatpush1.msra.mxu0 %v56
  %90 = vmatprep.subr.mxu0 %v59
  %91 = vmatpush1.msra.mxu0 %v58
  %92 = vmatprep.subr.mxu0 0.0
  %93 = vmatpush1.msra.mxu0 0.0
  %94 = vmatprep.subr.mxu0 0.0
  %95 = vmatpush1.msra.mxu0 0.0
  %96 = vmatprep.subr.mxu0 0.0
  %97 = vmatpush1.msra.mxu0 0.0
  %98 = vmatprep.subr.mxu0 0.0
  %99 = vmatpush1.msra.mxu0 0.0
  %100 = vmatprep.subr.mxu0 0.0
  %101 = vmatpush1.msra.mxu0 0.0
  %102 = vmatprep.subr.mxu0 0.0
  %103 = vmatpush1.msra.mxu0 0.0
  %104 = vmatprep.subr.mxu0 0.0
  %105 = vmatpush1.msra.mxu0 0.0
  %106 = vmatprep.subr.mxu0 0.0
  %107 = vmatpush1.msra.mxu0 0.0
  %108 = vmatprep.subr.mxu0 0.0
  %109 = vmatpush1.msra.mxu0 0.0
  %110 = vmatprep.subr.mxu0 0.0
  %111 = vmatpush1.msra.mxu0 0.0
  %112 = vmatprep.subr.mxu0 0.0
  %113 = vmatpush1.msra.mxu0 0.0
  %114 = vmatprep.subr.mxu0 0.0
  %115 = vmatpush1.msra.mxu0 0.0
  %116 = vmatprep.subr.mxu0 0.0
  %117 = vmatpush1.msra.mxu0 0.0
  %118 = vmatprep.subr.mxu0 0.0
  %119 = vmatpush1.msra.mxu0 0.0
  %120 = vmatprep.subr.mxu0 0.0
  %121 = vmatpush1.msra.mxu0 0.0
  %122 = vmatprep.subr.mxu0 0.0
  %123 = vmatpush1.msra.mxu0 0.0
  %124 = vmatprep.mubr.f32.mxu0 0.0
  %125 = vmatmul.mubr.f32.gmra.mrb[0].mxu0 %v26
  %v126 = vpop.f32.mrb[0].mxu0
  %v127 = vadd.f32 0.0, %v126
  %v128 = vpop.f32.mrb[0].mxu0
  %v129 = vadd.f32 0.0, %v128
  %130 = vmatprep.mubr.f32.mxu0 0.0
  %131 = vmatmul.mubr.f32.gmra.mrb[0].mxu0 %v27
  %v132 = vpop.f32.mrb[0].mxu0
  %v133 = vadd.f32 0.0, %v132
  %v134 = vpop.f32.mrb[0].mxu0
  %v135 = vadd.f32 0.0, %v134
  %136 = vdwg.mxu0
  %v137 = vadd.f32 %v22, %v127
  %v138 = vadd.f32 %v23, %v129
  %v139 = vadd.f32 %v24, %v133
  %v140 = vadd.f32 %v25, %v135
  %141 = vst [vmem:[#allocation2] sm:$0xff] %v137
  %142 = vst [vmem:[#allocation2 + $0x8] sm:$0xff] %v138
  %143 = vst [vmem:[#allocation2 + $0x10] sm:$0xff] %v139
  %144 = vst [vmem:[#allocation2 + $0x18] sm:$0xff] %v140
  // Predicated region
  $region18: #{geglu_pallas.1} parent=0 // pred_check
    %p145 = pneg %p14
  $region19: #{geglu_pallas.1} parent=0 // pred_check_branch
    %147 = sbr.rel (%p145) target = $region21
  $region20: #{geglu_pallas.1} parent=0 // pred_region
    %v148 = vld [vmem:[#allocation2] sm:$0xff]
    %v149 = vld [vmem:[#allocation2 + $0x8] sm:$0xff]
    %v150 = vld [vmem:[#allocation2 + $0x10] sm:$0xff]
    %v151 = vld [vmem:[#allocation2 + $0x18] sm:$0xff]
    %v152 = vld [vmem:[%s2] sm:$0x3]
    %v154 = vlaneseq
    %v155 = vshrl.u32 %v154, 7
    %v156 = vsub.s32 0, %v155
    %v157 = vrot.slane %v152, %v156
    %v158 = vlaneseq
    %v159 = vshrl.u32 %v158, 7
    %v160 = vsub.s32 1, %v159
    %v161 = vrot.slane %v152, %v160
    %v164 = vadd.f32 %v148, %v157
    %v165 = vadd.f32 %v149, %v161
    %v166 = vadd.f32 %v150, %v157
    %v167 = vadd.f32 %v151, %v161
    %v168 = vmul.f32 %v165, 0.5
    %v169 = vmul.f32 %v167, 0.5
    %v170 = vmul.f32 %v165, 0.70710677
    %v171 = vmul.f32 %v167, 0.70710677
    %v172 = verf.f32.pop %v170
    %v173 = verf.f32.pop %v171
    %v174 = vadd.f32 %v172, 1.0
    %v175 = vadd.f32 %v173, 1.0
    %v176 = vmul.f32 %v168, %v174
    %v177 = vmul.f32 %v169, %v175
    %v178 = vmul.f32 %v164, %v176
    %v179 = vmul.f32 %v166, %v177
    %180 = vst [vmem:[%s3] sm:$0xff] %v178
    %181 = vst [vmem:[%s3 + $0x8] sm:$0xff] %v179
  $region21: #{geglu_pallas.1} parent=0 // pred_fallthru
    _
  // Predicated region
  $region22: #{geglu_pallas.1} parent=0 // pred_check
    _
  $region23: #{geglu_pallas.1} parent=0 // pred_check_branch
    %183 = sbr.rel (0) target = $region25
  $region24: #{geglu_pallas.1} parent=0 // pred_region
    _
  $region25: #{geglu_pallas.1} parent=0 // pred_fallthru
    _
  // Predicated region
  $region26: #{geglu_pallas.1} parent=0 // pred_check
    _
  $region27: #{geglu_pallas.1} parent=0 // pred_check_branch
    %185 = sbr.rel (0) target = $region29
  $region28: #{geglu_pallas.1} parent=0 // pred_region
    _
  $region29: #{geglu_pallas.1} parent=0 // pred_fallthru
    _

</llo_original>
